<compile_context>
chip_gen: v7x
topology: tpu7x:2x2x1
jax: 0.10.0
libtpu: 0.0.40
codegen_flags: <defaults>
</compile_context>

<pallas_src>
import math
from functools import partial

import jax
import jax.numpy as jnp
from jax import lax
from jax.experimental import pallas as pl
from jax.experimental.pallas import tpu as pltpu

MXU_DTYPE = jnp.float32   # kernel is not MXU-bound; f32 operands for close parity with PyTorch
OUT_DTYPE = jnp.float32   # set jnp.bfloat16 if the downstream consumer takes bf16 (halves writeback)


def _erf(z):
    # Abramowitz & Stegun 7.1.26 polynomial erf, |abs err| <= 1.5e-7.
    # Exact divide (no approx reciprocal) so the "exact GELU" claim actually holds.
    a1, a2, a3, a4, a5 = 0.254829592, -0.284496736, 1.421413741, -1.453152027, 1.061405429
    p = 0.3275911
    za = jnp.abs(z)
    t = 1.0 / (1.0 + p * za)
    poly = ((((a5 * t + a4) * t + a3) * t + a2) * t + a1) * t
    e = 1.0 - poly * jnp.exp(-za * za)
    return jnp.where(z >= 0, e, -e)


def _gelu_exact(x):
    # Matches nn.GELU() default (erf-based).
    return 0.5 * x * (1.0 + _erf(x * (1.0 / math.sqrt(2.0))))


def _fcu_down_kernel(xp_ref, w_ref, b_ref, g_ref, bb_ref, o_ref, *, eps, inv_cout):
    # xp_ref : (Mblk, Cin)   pooled pixels; rows = flattened (batch, token) index
    # w_ref  : (Cin, Cout)   1x1-conv weight, lane-dense Cout (resident across the grid)
    # b_ref  : (1, Cout)     conv bias        (f32)
    # g_ref  : (1, Cout)     LayerNorm gamma  (f32)
    # bb_ref : (1, Cout)     LayerNorm beta   (f32)
    # o_ref  : (Mblk, Cout)  GELU(LN(conv)) tokens — single aligned full-block store
    y = jnp.dot(xp_ref[...], w_ref[...], preferred_element_type=jnp.float32)   # MXU, f32 acc
    y = y + b_ref[...]                                                         # conv bias
    # Single-pass LayerNorm statistics: s, ss -> mu, var (one VPU pass over y).
    s = jnp.sum(y, axis=-1, keepdims=True)
    ss = jnp.sum(y * y, axis=-1, keepdims=True)
    mu = s * inv_cout
    var = jnp.maximum(ss * inv_cout - mu * mu, 0.0)
    y = (y - mu) * lax.rsqrt(var + eps) * g_ref[...] + bb_ref[...]
    y = _gelu_exact(y)                                                         # exact GELU
    o_ref[...] = y.astype(o_ref.dtype)


def _choose_batch_block(B, N, Cin, Cout, in_bytes, out_bytes, vmem_budget=16 << 20):
    """Largest batch-block that (a) divides B, (b) fits double-buffered in+out blocks in
    the VMEM budget (sized for v7x's smaller VMEM), (c) leaves >=2 grid steps so the
    'parallel' grid axis can shard across both v7x TensorCores, preferring blocks whose
    row count is a sublane (8) multiple."""
    per_b = 2 * N * (Cin * in_bytes + Cout * out_bytes)      # 2x double-buffered in + out
    cap_vmem = max(1, vmem_budget // max(per_b, 1))
    cap_steps = max(1, B // 2)                                # keep >=2 grid steps when B >= 2
    target = int(min(B, cap_vmem, cap_steps))
    best = 1
    for bb in range(target, 0, -1):
        if B % bb:
            continue
        if (bb * N) % 8 == 0:
            return bb
        if best == 1:
            best = bb
    return best


def fcu_down_pallas(x, x_t, w, b, gamma, beta, *, dw_stride, eps=1e-6,
                    mxu_dtype=MXU_DTYPE, out_dtype=OUT_DTYPE):
    """FCUDown forward.

    x     : (B, Cin, H, W)  NCHW feature map
    x_t   : (B, Nt, Cout)   transformer tokens (only token 0 is used)
    w, b  : Conv2d(Cin, Cout, 1) weight (Cout, Cin, 1, 1) and bias (Cout,)
    gamma, beta : LayerNorm(Cout) affine params
    returns (B, 1 + (H//dw)*(W//dw), Cout)
    """
    B, Cin, H, W = x.shape
    Cout = w.shape[0]
    assert H % dw_stride == 0 and W % dw_stride == 0
    Hb, Wb = H // dw_stride, W // dw_stride
    N = Hb * Wb
    M = B * N

    # AvgPool2d commutes with the 1x1 conv (both linear): pool FIRST.  The transpose is
    # an operand of the reduction so XLA fuses it — one pass over x, pooled tensor is
    # emitted directly in (B, Hb, Wb, Cin) -> row-major (M, Cin) order (no extra copy).
    xp = jnp.transpose(x.reshape(B, Cin, Hb, dw_stride, Wb, dw_stride), (0, 2, 4, 3, 5, 1))
    xp = xp.mean(axis=(3, 4)).reshape(M, Cin).astype(mxu_dtype)

    wmat = w.reshape(Cout, Cin).T.astype(mxu_dtype)            # (Cin, Cout), lane-dense output
    b2 = b.reshape(1, Cout).astype(jnp.float32)
    g2 = gamma.reshape(1, Cout).astype(jnp.float32)
    bb2 = beta.reshape(1, Cout).astype(jnp.float32)

    in_bytes = jnp.dtype(mxu_dtype).itemsize
    out_bytes = jnp.dtype(out_dtype).itemsize
    bblk = _choose_batch_block(B, N, Cin, Cout, in_bytes, out_bytes)
    mblk = bblk * N
    grid = (M // mblk,)

    tokens = pl.pallas_call(
        partial(_fcu_down_kernel, eps=eps, inv_cout=1.0 / Cout),
        out_shape=jax.ShapeDtypeStruct((M, Cout), out_dtype),
        grid=grid,
        in_specs=[
            pl.BlockSpec((mblk, Cin), lambda i: (i, 0)),       # pooled pixel rows
            pl.BlockSpec((Cin, Cout), lambda i: (0, 0)),       # weight (resident)
            pl.BlockSpec((1, Cout), lambda i: (0, 0)),         # conv bias
            pl.BlockSpec((1, Cout), lambda i: (0, 0)),         # ln gamma
            pl.BlockSpec((1, Cout), lambda i: (0, 0)),         # ln beta
        ],
        out_specs=pl.BlockSpec((mblk, Cout), lambda i: (i, 0)),
        compiler_params=pltpu.CompilerParams(
            dimension_semantics=("parallel",),                 # shard grid steps across TCs
            vmem_limit_bytes=32 * 1024 * 1024,                 # safe on v5e/v6e/v7x
        ),
    )(xp, wmat, b2, g2, bb2)

    # 1-row class-token concat stays in the wrapper: every kernel store is a full,
    # sublane-aligned block (no offset-1 rotate / masked vst) and the cls DMA stream
    # per grid step is gone.
    tokens = tokens.reshape(B, N, Cout)
    cls = x_t[:, :1, :].astype(out_dtype)
    return jnp.concatenate([cls, tokens], axis=1)


# ----------------------- pure-JAX reference (original PyTorch op order) -----------------------
def fcu_down_reference(x, x_t, w, b, gamma, beta, dw_stride, eps=1e-6):
    B, Cin, H, W = x.shape
    Cout = w.shape[0]
    y = jnp.einsum("bchw,oc->bohw", x, w.reshape(Cout, Cin),
                   precision=lax.Precision.HIGHEST) + b[None, :, None, None]
    Hb, Wb = H // dw_stride, W // dw_stride
    y = y.reshape(B, Cout, Hb, dw_stride, Wb, dw_stride).mean(axis=(3, 5))
    y = y.reshape(B, Cout, Hb * Wb).transpose(0, 2, 1)
    mu = y.mean(-1, keepdims=True)
    var = ((y - mu) ** 2).mean(-1, keepdims=True)
    y = (y - mu) / jnp.sqrt(var + eps) * gamma + beta
    y = jax.nn.gelu(y, approximate=False)
    return jnp.concatenate([x_t[:, :1, :], y], axis=1)


if __name__ == "__main__":
    B, Cin, H, W = 2, 16, 16, 16
    Cout, dw = 128, 4                 # lane-dense outplanes (multiple of 128), dw_stride=4
    N = (H // dw) * (W // dw)

    key = jax.random.PRNGKey(0)
    kx, kt, kw, kb, kg, kbt = jax.random.split(key, 6)
    x = jax.random.normal(kx, (B, Cin, H, W), jnp.float32)
    x_t = jax.random.normal(kt, (B, N + 1, Cout), jnp.float32)
    w = jax.random.normal(kw, (Cout, Cin, 1, 1), jnp.float32) / math.sqrt(Cin)
    b = jax.random.normal(kb, (Cout,), jnp.float32) * 0.02
    gamma = 1.0 + 0.1 * jax.random.normal(kg, (Cout,), jnp.float32)
    beta = 0.05 * jax.random.normal(kbt, (Cout,), jnp.float32)

    fwd = jax.jit(partial(fcu_down_pallas, dw_stride=dw))
    out = fwd(x, x_t, w, b, gamma, beta)
    jax.block_until_ready(out)

    ref = fcu_down_reference(x, x_t, w, b, gamma, beta, dw)
    assert out.shape == (B, N + 1, Cout), out.shape
    assert bool(jnp.all(jnp.isfinite(out)))
    max_err = float(jnp.max(jnp.abs(out - ref)))
    assert max_err < 5e-3, f"max abs err {max_err}"   # f32 MXU path + polynomial erf tolerance
    print("KERNEL_OK")
</pallas_src>

<mosaic_0001>
module attributes {stable_mosaic.version = 11 : i64} {
  func.func @_fcu_down_kernel(%arg0: i32, %arg1: memref<16x16xf32, #tpu.memory_space<vmem>>, %arg2: memref<16x128xf32, #tpu.memory_space<vmem>>, %arg3: memref<1x128xf32, #tpu.memory_space<vmem>>, %arg4: memref<1x128xf32, #tpu.memory_space<vmem>>, %arg5: memref<1x128xf32, #tpu.memory_space<vmem>>, %arg6: memref<16x128xf32, #tpu.memory_space<vmem>>) attributes {dimension_semantics = [#tpu.dimension_semantics<parallel>], iteration_bounds = array<i64: 2>, scalar_prefetch = 0 : i64, scratch_operands = 0 : i64, tpu.core_type = #tpu.core_type<tc>, window_params = [{transform_indices = @transform_0, window_bounds = array<i64: 16, 16>}, {pipeline_mode = #tpu.pipeline_mode<synchronous>, transform_indices = @transform_1, window_bounds = array<i64: 16, 128>}, {pipeline_mode = #tpu.pipeline_mode<synchronous>, transform_indices = @transform_2, window_bounds = array<i64: 1, 128>}, {pipeline_mode = #tpu.pipeline_mode<synchronous>, transform_indices = @transform_3, window_bounds = array<i64: 1, 128>}, {pipeline_mode = #tpu.pipeline_mode<synchronous>, transform_indices = @transform_4, window_bounds = array<i64: 1, 128>}, {transform_indices = @transform_5, window_bounds = array<i64: 16, 128>}]} {
    %c0 = arith.constant 0 : index
    %c0_0 = arith.constant 0 : index
    %0 = vector.load %arg1[%c0, %c0_0] : memref<16x16xf32, #tpu.memory_space<vmem>>, vector<16x16xf32>
    %c0_1 = arith.constant 0 : index
    %c0_2 = arith.constant 0 : index
    %1 = vector.load %arg2[%c0_1, %c0_2] : memref<16x128xf32, #tpu.memory_space<vmem>>, vector<16x128xf32>
    %cst = arith.constant dense<0.000000e+00> : vector<16x128xf32>
    %2 = tpu.matmul %0, %1, %cst {dimension_numbers = #tpu.dot_dimension_numbers<[1], [0], [0], [1], [0, 0, 1, 1], [], []>} : vector<16x16xf32>, vector<16x128xf32>, vector<16x128xf32> -> vector<16x128xf32>
    %c0_3 = arith.constant 0 : index
    %c0_4 = arith.constant 0 : index
    %3 = vector.load %arg3[%c0_3, %c0_4] : memref<1x128xf32, #tpu.memory_space<vmem>>, vector<1x128xf32>
    %4 = vector.broadcast %3 : vector<1x128xf32> to vector<16x128xf32>
    %5 = arith.addf %2, %4 : vector<16x128xf32>
    %cst_5 = arith.constant dense<0.000000e+00> : vector<16xf32>
    %6 = vector.multi_reduction <add>, %5, %cst_5 [1] : vector<16x128xf32> to vector<16xf32>
    %7 = vector.shape_cast %6 : vector<16xf32> to vector<16x1xf32>
    %8 = arith.mulf %5, %5 : vector<16x128xf32>
    %cst_6 = arith.constant dense<0.000000e+00> : vector<16xf32>
    %9 = vector.multi_reduction <add>, %8, %cst_6 [1] : vector<16x128xf32> to vector<16xf32>
    %10 = vector.shape_cast %9 : vector<16xf32> to vector<16x1xf32>
    %cst_7 = arith.constant 7.812500e-03 : f32
    %11 = vector.broadcast %cst_7 : f32 to vector<16x1xf32>
    %12 = arith.mulf %7, %11 : vector<16x1xf32>
    %cst_8 = arith.constant 7.812500e-03 : f32
    %13 = vector.broadcast %cst_8 : f32 to vector<16x1xf32>
    %14 = arith.mulf %10, %13 : vector<16x1xf32>
    %15 = arith.mulf %12, %12 : vector<16x1xf32>
    %16 = arith.subf %14, %15 : vector<16x1xf32>
    %cst_9 = arith.constant 0.000000e+00 : f32
    %17 = vector.broadcast %cst_9 : f32 to vector<16x1xf32>
    %18 = arith.maximumf %16, %17 : vector<16x1xf32>
    %19 = vector.broadcast %12 : vector<16x1xf32> to vector<16x128xf32>
    %20 = arith.subf %5, %19 : vector<16x128xf32>
    %cst_10 = arith.constant 9.99999997E-7 : f32
    %21 = vector.broadcast %cst_10 : f32 to vector<16x1xf32>
    %22 = arith.addf %18, %21 : vector<16x1xf32>
    %23 = math.rsqrt %22 : vector<16x1xf32>
    %24 = vector.broadcast %23 : vector<16x1xf32> to vector<16x128xf32>
    %25 = arith.mulf %20, %24 : vector<16x128xf32>
    %c0_11 = arith.constant 0 : index
    %c0_12 = arith.constant 0 : index
    %26 = vector.load %arg4[%c0_11, %c0_12] : memref<1x128xf32, #tpu.memory_space<vmem>>, vector<1x128xf32>
    %27 = vector.broadcast %26 : vector<1x128xf32> to vector<16x128xf32>
    %28 = arith.mulf %25, %27 : vector<16x128xf32>
    %c0_13 = arith.constant 0 : index
    %c0_14 = arith.constant 0 : index
    %29 = vector.load %arg5[%c0_13, %c0_14] : memref<1x128xf32, #tpu.memory_space<vmem>>, vector<1x128xf32>
    %30 = vector.broadcast %29 : vector<1x128xf32> to vector<16x128xf32>
    %31 = arith.addf %28, %30 : vector<16x128xf32>
    %cst_15 = arith.constant 5.000000e-01 : f32
    %32 = vector.broadcast %cst_15 : f32 to vector<16x128xf32>
    %33 = arith.mulf %32, %31 : vector<16x128xf32>
    %cst_16 = arith.constant 0.707106769 : f32
    %34 = vector.broadcast %cst_16 : f32 to vector<16x128xf32>
    %35 = arith.mulf %31, %34 : vector<16x128xf32>
    %36 = math.absf %35 : vector<16x128xf32>
    %cst_17 = arith.constant 0.327591091 : f32
    %37 = vector.broadcast %cst_17 : f32 to vector<16x128xf32>
    %38 = arith.mulf %37, %36 : vector<16x128xf32>
    %cst_18 = arith.constant 1.000000e+00 : f32
    %39 = vector.broadcast %cst_18 : f32 to vector<16x128xf32>
    %40 = arith.addf %39, %38 : vector<16x128xf32>
    %cst_19 = arith.constant 1.000000e+00 : f32
    %41 = vector.broadcast %cst_19 : f32 to vector<16x128xf32>
    %42 = arith.divf %41, %40 : vector<16x128xf32>
    %cst_20 = arith.constant 1.06140542 : f32
    %43 = vector.broadcast %cst_20 : f32 to vector<16x128xf32>
    %44 = arith.mulf %43, %42 : vector<16x128xf32>
    %cst_21 = arith.constant -1.45315206 : f32
    %45 = vector.broadcast %cst_21 : f32 to vector<16x128xf32>
    %46 = arith.addf %44, %45 : vector<16x128xf32>
    %47 = arith.mulf %46, %42 : vector<16x128xf32>
    %cst_22 = arith.constant 1.42141378 : f32
    %48 = vector.broadcast %cst_22 : f32 to vector<16x128xf32>
    %49 = arith.addf %47, %48 : vector<16x128xf32>
    %50 = arith.mulf %49, %42 : vector<16x128xf32>
    %cst_23 = arith.constant -0.284496725 : f32
    %51 = vector.broadcast %cst_23 : f32 to vector<16x128xf32>
    %52 = arith.addf %50, %51 : vector<16x128xf32>
    %53 = arith.mulf %52, %42 : vector<16x128xf32>
    %cst_24 = arith.constant 0.254829586 : f32
    %54 = vector.broadcast %cst_24 : f32 to vector<16x128xf32>
    %55 = arith.addf %53, %54 : vector<16x128xf32>
    %56 = arith.mulf %55, %42 : vector<16x128xf32>
    %cst_25 = arith.constant 0.000000e+00 : f32
    %57 = vector.broadcast %cst_25 : f32 to vector<16x128xf32>
    %58 = arith.subf %57, %36 : vector<16x128xf32>
    %59 = arith.mulf %58, %36 : vector<16x128xf32>
    %60 = math.exp %59 : vector<16x128xf32>
    %61 = arith.mulf %56, %60 : vector<16x128xf32>
    %cst_26 = arith.constant 1.000000e+00 : f32
    %62 = vector.broadcast %cst_26 : f32 to vector<16x128xf32>
    %63 = arith.subf %62, %61 : vector<16x128xf32>
    %cst_27 = arith.constant 0.000000e+00 : f32
    %64 = vector.broadcast %cst_27 : f32 to vector<16x128xf32>
    %65 = arith.cmpf oge, %35, %64 : vector<16x128xf32>
    %cst_28 = arith.constant 0.000000e+00 : f32
    %66 = vector.broadcast %cst_28 : f32 to vector<16x128xf32>
    %67 = arith.subf %66, %63 : vector<16x128xf32>
    %68 = arith.select %65, %63, %67 : vector<16x128xi1>, vector<16x128xf32>
    %cst_29 = arith.constant 1.000000e+00 : f32
    %69 = vector.broadcast %cst_29 : f32 to vector<16x128xf32>
    %70 = arith.addf %69, %68 : vector<16x128xf32>
    %71 = arith.mulf %33, %70 : vector<16x128xf32>
    %c0_30 = arith.constant 0 : index
    %c0_31 = arith.constant 0 : index
    %72 = vector.load %arg6[%c0_30, %c0_31] : memref<16x128xf32, #tpu.memory_space<vmem>>, vector<16x128xf32>
    tpu.vector_store %arg6[%c0_30, %c0_31], %71 {strides = array<i32>} : memref<16x128xf32, #tpu.memory_space<vmem>>, vector<16x128xf32>,
    return
  }
  func.func @transform_0(%arg0: i32) -> (i32, i32) {
    %c0_i32 = arith.constant 0 : i32
    %c0_i32_0 = arith.constant 0 : i32
    return %arg0, %c0_i32 : i32, i32
  }
  func.func @transform_1(%arg0: i32) -> (i32, i32) {
    %c0_i32 = arith.constant 0 : i32
    %c0_i32_0 = arith.constant 0 : i32
    %c0_i32_1 = arith.constant 0 : i32
    return %c0_i32, %c0_i32_0 : i32, i32
  }
  func.func @transform_2(%arg0: i32) -> (i32, i32) {
    %c0_i32 = arith.constant 0 : i32
    %c0_i32_0 = arith.constant 0 : i32
    %c0_i32_1 = arith.constant 0 : i32
    return %c0_i32, %c0_i32_0 : i32, i32
  }
  func.func @transform_3(%arg0: i32) -> (i32, i32) {
    %c0_i32 = arith.constant 0 : i32
    %c0_i32_0 = arith.constant 0 : i32
    %c0_i32_1 = arith.constant 0 : i32
    return %c0_i32, %c0_i32_0 : i32, i32
  }
  func.func @transform_4(%arg0: i32) -> (i32, i32) {
    %c0_i32 = arith.constant 0 : i32
    %c0_i32_0 = arith.constant 0 : i32
    %c0_i32_1 = arith.constant 0 : i32
    return %c0_i32, %c0_i32_0 : i32, i32
  }
  func.func @transform_5(%arg0: i32) -> (i32, i32) {
    %c0_i32 = arith.constant 0 : i32
    %c0_i32_0 = arith.constant 0 : i32
    return %arg0, %c0_i32 : i32, i32
  }
}

</mosaic_0001>

<llo_original>
// kernel: fcu_down_pallas.1
$region0: #{fcu_down_pallas.1}
  #allocation0 [shape = 'u32[]', space=smem, size = 0x4, offset = 0x4, fixed_abs, tag = 'smem constant byte address 0x4 - core index']
  #allocation1 [shape = 'u32[144,128]{1,0:T(1,128)}', space=vmem, size = 0x12000, scoped, tag = 'internal scratch']
  %s0 = inlined_call_operand.vmem [shape: f32[32,16], index: 0, kind: input, shape index: {}]
  %s1 = inlined_call_operand.vmem [shape: f32[16,128], index: 1, kind: input, shape index: {}]
  %s2 = inlined_call_operand.vmem [shape: f32[1,128], index: 2, kind: input, shape index: {}]
  %s3 = inlined_call_operand.vmem [shape: f32[1,128], index: 3, kind: input, shape index: {}]
  %s4 = inlined_call_operand.vmem [shape: f32[1,128], index: 4, kind: input, shape index: {}]
  %s5 = inlined_call_operand.vmem [shape: f32[32,128], index: 5, kind: output, shape index: {}]
  %s6 = sld [smem:[#allocation0]]
  $region53: #{fcu_down_pallas.1} parent=0
    _
  %s8 = ssub.s32 1, %s6
  %s9 = scalar_select 0, %s8, %s6
  loop: start=0, step=1, limit=4
  $region2: #{fcu_down_pallas.1} parent=0 // loop_pre_header
    _
  $region3: #{fcu_down_pallas.1} parent=0 // loop_header
    %s11 = sphi 0, %s15
    %p12 = scmp.ge.s32.totalorder %s11, 4
    %s21 = sphi 0, %s23
    %s24 = sphi 0, %s21
    %s25 = sphi 0, %s24
    %s41 = sphi 0, %s25
    %s45 = sphi 0, %s45
    %s47 = sphi 0, %s45
    %s48 = sphi 0, %s47
    %s62 = sphi 0, %s48
    %s66 = sphi 0, %s66
    %s68 = sphi 0, %s66
    %s69 = sphi 0, %s68
    %s83 = sphi 0, %s69
    %s87 = sphi 0, %s87
    %s89 = sphi 0, %s87
    %s90 = sphi 0, %s89
    %s104 = sphi 0, %s90
    %s108 = sphi 0, %s108
    %s110 = sphi 0, %s108
    %s111 = sphi 0, %s110
    %s125 = sphi 0, %s111
    %s131 = sphi 0, %s133
    %s134 = sphi 0, %s131
    %s135 = sphi 0, %s134
    %s151 = sphi 0, %s135
  $region4: #{fcu_down_pallas.1} parent=0 // loop_header_branch
    %14 = sbr.rel (%p12) target = $region8
  $region5: #{fcu_down_pallas.1} parent=0 // loop_body
    %s16 = ssub.s32 %s11, 1
    %s17 = ssub.s32 %s11, 2
    %s18 = sadd.s32 %s11, 1
    %s19 = ssub.s32 %s11, %s18
    %p20 = scmp.eq.s32.totalorder %s19, 0
    %s22 = sadd.s32 %s21, 1
    %s23 = scalar_select %p20, %s21, %s22
    %p26 = pneg %p20
    %p27 = scmp.eq.s32.totalorder %s11, 1
    %p28 = por %p26, %p27
    %p29 = scmp.ne.s32.totalorder %s21, %s24
    %p30 = scmp.eq.s32.totalorder %s11, 0
    %p31 = por %p29, %p30
    %p32 = scmp.ne.s32.totalorder %s21, %s24
    %p33 = scmp.eq.s32.totalorder %s16, 1
    %p34 = por %p32, %p33
    %p35 = scmp.ne.s32.totalorder %s24, %s25
    %p36 = scmp.eq.s32.totalorder %s16, 0
    %p37 = por %p35, %p36
    %p38 = scmp.ne.s32.totalorder %s24, %s25
    %p39 = scmp.eq.s32.totalorder %s17, 1
    %p40 = por %p38, %p39
    %p42 = scmp.ne.s32.totalorder %s25, %s41
    %p43 = scmp.eq.s32.totalorder %s17, 0
    %p44 = por %p42, %p43
    %s46 = sadd.s32 %s45, 1
    %p49 = scmp.eq.s32.totalorder %s11, 1
    %p50 = scmp.ne.s32.totalorder %s45, %s47
    %p51 = scmp.eq.s32.totalorder %s11, 0
    %p52 = por %p50, %p51
    %p53 = scmp.ne.s32.totalorder %s45, %s47
    %p54 = scmp.eq.s32.totalorder %s16, 1
    %p55 = por %p53, %p54
    %p56 = scmp.ne.s32.totalorder %s47, %s48
    %p57 = scmp.eq.s32.totalorder %s16, 0
    %p58 = por %p56, %p57
    %p59 = scmp.ne.s32.totalorder %s47, %s48
    %p60 = scmp.eq.s32.totalorder %s17, 1
    %p61 = por %p59, %p60
    %p63 = scmp.ne.s32.totalorder %s48, %s62
    %p64 = scmp.eq.s32.totalorder %s17, 0
    %p65 = por %p63, %p64
    %s67 = sadd.s32 %s66, 1
    %p70 = scmp.eq.s32.totalorder %s11, 1
    %p71 = scmp.ne.s32.totalorder %s66, %s68
    %p72 = scmp.eq.s32.totalorder %s11, 0
    %p73 = por %p71, %p72
    %p74 = scmp.ne.s32.totalorder %s66, %s68
    %p75 = scmp.eq.s32.totalorder %s16, 1
    %p76 = por %p74, %p75
    %p77 = scmp.ne.s32.totalorder %s68, %s69
    %p78 = scmp.eq.s32.totalorder %s16, 0
    %p79 = por %p77, %p78
    %p80 = scmp.ne.s32.totalorder %s68, %s69
    %p81 = scmp.eq.s32.totalorder %s17, 1
    %p82 = por %p80, %p81
    %p84 = scmp.ne.s32.totalorder %s69, %s83
    %p85 = scmp.eq.s32.totalorder %s17, 0
    %p86 = por %p84, %p85
    %s88 = sadd.s32 %s87, 1
    %p91 = scmp.eq.s32.totalorder %s11, 1
    %p92 = scmp.ne.s32.totalorder %s87, %s89
    %p93 = scmp.eq.s32.totalorder %s11, 0
    %p94 = por %p92, %p93
    %p95 = scmp.ne.s32.totalorder %s87, %s89
    %p96 = scmp.eq.s32.totalorder %s16, 1
    %p97 = por %p95, %p96
    %p98 = scmp.ne.s32.totalorder %s89, %s90
    %p99 = scmp.eq.s32.totalorder %s16, 0
    %p100 = por %p98, %p99
    %p101 = scmp.ne.s32.totalorder %s89, %s90
    %p102 = scmp.eq.s32.totalorder %s17, 1
    %p103 = por %p101, %p102
    %p105 = scmp.ne.s32.totalorder %s90, %s104
    %p106 = scmp.eq.s32.totalorder %s17, 0
    %p107 = por %p105, %p106
    %s109 = sadd.s32 %s108, 1
    %p112 = scmp.eq.s32.totalorder %s11, 1
    %p113 = scmp.ne.s32.totalorder %s108, %s110
    %p114 = scmp.eq.s32.totalorder %s11, 0
    %p115 = por %p113, %p114
    %p116 = scmp.ne.s32.totalorder %s108, %s110
    %p117 = scmp.eq.s32.totalorder %s16, 1
    %p118 = por %p116, %p117
    %p119 = scmp.ne.s32.totalorder %s110, %s111
    %p120 = scmp.eq.s32.totalorder %s16, 0
    %p121 = por %p119, %p120
    %p122 = scmp.ne.s32.totalorder %s110, %s111
    %p123 = scmp.eq.s32.totalorder %s17, 1
    %p124 = por %p122, %p123
    %p126 = scmp.ne.s32.totalorder %s111, %s125
    %p127 = scmp.eq.s32.totalorder %s17, 0
    %p128 = por %p126, %p127
    %s129 = ssub.s32 %s11, %s18
    %p130 = scmp.eq.s32.totalorder %s129, 0
    %s132 = sadd.s32 %s131, 1
    %s133 = scalar_select %p130, %s131, %s132
    %p136 = pneg %p130
    %p137 = scmp.eq.s32.totalorder %s11, 1
    %p138 = por %p136, %p137
    %p139 = scmp.ne.s32.totalorder %s131, %s134
    %p140 = scmp.eq.s32.totalorder %s11, 0
    %p141 = por %p139, %p140
    %p142 = scmp.ne.s32.totalorder %s131, %s134
    %p143 = scmp.eq.s32.totalorder %s16, 1
    %p144 = por %p142, %p143
    %p145 = scmp.ne.s32.totalorder %s134, %s135
    %p146 = scmp.eq.s32.totalorder %s16, 0
    %p147 = por %p145, %p146
    %p148 = scmp.ne.s32.totalorder %s134, %s135
    %p149 = scmp.eq.s32.totalorder %s17, 1
    %p150 = por %p148, %p149
    %p152 = scmp.ne.s32.totalorder %s135, %s151
    %p153 = scmp.eq.s32.totalorder %s17, 0
    %p154 = por %p152, %p153
    %p155 = scmp.le.s32.totalorder 1, %s11
    %p156 = scmp.lt.s32.totalorder %s11, 3
    %p157 = pnand %p155, %p156
    %p158 = pneg %p157
    // Predicated region
    $region9: #{fcu_down_pallas.1} parent=5 // pred_check
      _
    $region10: #{fcu_down_pallas.1} parent=5 // pred_check_branch
      %160 = sbr.rel (%p157) target = $region12
    $region11: #{fcu_down_pallas.1} parent=5 // pred_region
      %s161 = ssub.s32 %s11, 1
      // Predicated region
      $region13: #{fcu_down_pallas.1} parent=11 // pred_check
        %p162 = pneg %p58
      $region14: #{fcu_down_pallas.1} parent=11 // pred_check_branch
        %164 = sbr.rel (%p162) target = $region16
      $region15: #{fcu_down_pallas.1} parent=11 // pred_region
        _
      $region16: #{fcu_down_pallas.1} parent=11 // pred_fallthru
        _
      // Predicated region
      $region17: #{fcu_down_pallas.1} parent=11 // pred_check
        %p165 = pneg %p79
      $region18: #{fcu_down_pallas.1} parent=11 // pred_check_branch
        %167 = sbr.rel (%p165) target = $region20
      $region19: #{fcu_down_pallas.1} parent=11 // pred_region
        _
      $region20: #{fcu_down_pallas.1} parent=11 // pred_fallthru
        _
      // Predicated region
      $region21: #{fcu_down_pallas.1} parent=11 // pred_check
        %p168 = pneg %p100
      $region22: #{fcu_down_pallas.1} parent=11 // pred_check_branch
        %170 = sbr.rel (%p168) target = $region24
      $region23: #{fcu_down_pallas.1} parent=11 // pred_region
        _
      $region24: #{fcu_down_pallas.1} parent=11 // pred_fallthru
        _
      // Predicated region
      $region25: #{fcu_down_pallas.1} parent=11 // pred_check
        %p171 = pneg %p121
      $region26: #{fcu_down_pallas.1} parent=11 // pred_check_branch
        %173 = sbr.rel (%p171) target = $region28
      $region27: #{fcu_down_pallas.1} parent=11 // pred_region
        _
      $region28: #{fcu_down_pallas.1} parent=11 // pred_fallthru
        _
    $region12: #{fcu_down_pallas.1} parent=5 // pred_fallthru
      _
    %p174 = scmp.lt.s32.totalorder %s11, 2
    // Predicated region
    $region29: #{fcu_down_pallas.1} parent=5 // pred_check
      %p175 = pneg %p174
    $region30: #{fcu_down_pallas.1} parent=5 // pred_check_branch
      %177 = sbr.rel (%p175) target = $region32
    $region31: #{fcu_down_pallas.1} parent=5 // pred_region
      // Predicated region
      $region33: #{fcu_down_pallas.1} parent=31 // pred_check
        %p178 = pneg %p31
      $region34: #{fcu_down_pallas.1} parent=31 // pred_check_branch
        %180 = sbr.rel (%p178) target = $region36
      $region35: #{fcu_down_pallas.1} parent=31 // pred_region
        %s181 = smul.u32 2, %s11
        %p182 = scmp.lt.s32.totalorder %s181, 3
        %s183 = scalar_select %p182, %s181, 3
        %s184 = smul.addr %s183, 8
        %s185 = scalar_lea.vmem %s0, %s184
        %s186 = smul.u32 2, %s11
      $region36: #{fcu_down_pallas.1} parent=31 // pred_fallthru
        _
    $region32: #{fcu_down_pallas.1} parent=5 // pred_fallthru
      _
    %p187 = scmp.le.s32.totalorder 1, %s11
    %p188 = scmp.lt.s32.totalorder %s11, 3
    %p189 = pnand %p187, %p188
    %p190 = pneg %p189
    // Predicated region
    $region37: #{fcu_down_pallas.1} parent=5 // pred_check
      _
    $region38: #{fcu_down_pallas.1} parent=5 // pred_check_branch
      %192 = sbr.rel (%p189) target = $region40
    $region39: #{fcu_down_pallas.1} parent=5 // pred_region
      %s193 = ssub.s32 %s11, 1
      %s194 = smul.u32 2, %s16
      %p195 = scmp.lt.s32.totalorder %s194, 3
      %s196 = scalar_select %p195, %s194, 3
      %s197 = smul.addr %s196, 8
      %s198 = scalar_lea.vmem %s0, %s197
      %p199 = pneg %p37
      %p200 = pneg %p34
      %p201 = pneg %p58
      %p202 = pneg %p55
      %p203 = pneg %p79
      %p204 = pneg %p76
      %p205 = pneg %p100
      %p206 = pneg %p97
      %p207 = pneg %p121
      %p208 = pneg %p118
      %p209 = pneg %p147
      %p210 = pneg %p144
      %s211 = smul.u32 2, %s16
      %p212 = scmp.lt.s32.totalorder %s211, 3
      %s213 = scalar_select %p212, %s211, 3
      %s214 = smul.addr %s213, 8
      %s215 = scalar_lea.vmem %s5, %s214
      %s216 = smul.u32 2, %s16
      %p217 = scmp.lt.s32.totalorder %s216, 3
      %s218 = scalar_select %p217, %s216, 3
      %s219 = smul.addr %s218, 8
      %s220 = scalar_lea.vmem %s0, %s219
      %s221 = smul.u32 2, %s16
      %s222 = smul.u32 2, %s16
      %p223 = scmp.lt.s32.totalorder %s222, 3
      %s224 = scalar_select %p223, %s222, 3
      %s225 = smul.addr %s224, 8
      %s226 = scalar_lea.vmem %s5, %s225
      %s227 = smul.u32 2, %s16
      %v228 = vld [vmem:[%s220] sm:$0xff]
      %v229 = vld [vmem:[%s220 + $0x8] sm:$0xff]
      %v230 = vld [vmem:[%s1] sm:$0xff]
      %v231 = vld [vmem:[%s1 + $0x8] sm:$0xff]
      %v232 = vld [vmem:[%s2] sm:$0x1]
      %v234 = vlaneseq
      %v235 = vshrl.u32 %v234, 7
      %v236 = vsub.s32 0, %v235
      %v237 = vrot.slane %v232, %v236
      %vm239 = vcmask 130048
      %v241 = vsel %vm239, %v228, 0
      %v244 = vsel %vm239, %v229, 0
      %246 = vmatprep.subr.mxu0 0.0
      %247 = vmatpush1.msra.mxu0 %v230
      %248 = vmatprep.subr.mxu0 0.0
      %249 = vmatpush1.msra.mxu0 %v231
      %250 = vmatprep.subr.mxu0 0.0
      %251 = vmatpush1.msra.mxu0 0.0
      %252 = vmatprep.subr.mxu0 0.0
      %253 = vmatpush1.msra.mxu0 0.0
      %254 = vmatprep.subr.mxu0 0.0
      %255 = vmatpush1.msra.mxu0 0.0
      %256 = vmatprep.subr.mxu0 0.0
      %257 = vmatpush1.msra.mxu0 0.0
      %258 = vmatprep.subr.mxu0 0.0
      %259 = vmatpush1.msra.mxu0 0.0
      %260 = vmatprep.subr.mxu0 0.0
      %261 = vmatpush1.msra.mxu0 0.0
      %262 = vmatprep.subr.mxu0 0.0
      %263 = vmatpush1.msra.mxu0 0.0
      %264 = vmatprep.subr.mxu0 0.0
      %265 = vmatpush1.msra.mxu0 0.0
      %266 = vmatprep.subr.mxu0 0.0
      %267 = vmatpush1.msra.mxu0 0.0
      %268 = vmatprep.subr.mxu0 0.0
      %269 = vmatpush1.msra.mxu0 0.0
      %270 = vmatprep.subr.mxu0 0.0
      %271 = vmatpush1.msra.mxu0 0.0
      %272 = vmatprep.subr.mxu0 0.0
      %273 = vmatpush1.msra.mxu0 0.0
      %274 = vmatprep.subr.mxu0 0.0
      %275 = vmatpush1.msra.mxu0 0.0
      %276 = vmatprep.subr.mxu0 0.0
      %277 = vmatpush1.msra.mxu0 0.0
      %278 = vmatprep.subr.mxu0 0.0
      %279 = vmatpush1.msra.mxu0 0.0
      %280 = vmatprep.subr.mxu0 0.0
      %281 = vmatpush1.msra.mxu0 0.0
      %282 = vmatprep.subr.mxu0 0.0
      %283 = vmatpush1.msra.mxu0 0.0
      %284 = vmatprep.subr.mxu0 0.0
      %285 = vmatpush1.msra.mxu0 0.0
      %286 = vmatprep.subr.mxu0 0.0
      %287 = vmatpush1.msra.mxu0 0.0
      %288 = vmatprep.subr.mxu0 0.0
      %289 = vmatpush1.msra.mxu0 0.0
      %290 = vmatprep.subr.mxu0 0.0
      %291 = vmatpush1.msra.mxu0 0.0
      %292 = vmatprep.subr.mxu0 0.0
      %293 = vmatpush1.msra.mxu0 0.0
      %294 = vmatprep.subr.mxu0 0.0
      %295 = vmatpush1.msra.mxu0 0.0
      %296 = vmatprep.subr.mxu0 0.0
      %297 = vmatpush1.msra.mxu0 0.0
      %298 = vmatprep.subr.mxu0 0.0
      %299 = vmatpush1.msra.mxu0 0.0
      %300 = vmatprep.subr.mxu0 0.0
      %301 = vmatpush1.msra.mxu0 0.0
      %302 = vmatprep.subr.mxu0 0.0
      %303 = vmatpush1.msra.mxu0 0.0
      %304 = vmatprep.subr.mxu0 0.0
      %305 = vmatpush1.msra.mxu0 0.0
      %306 = vmatprep.subr.mxu0 0.0
      %307 = vmatpush1.msra.mxu0 0.0
      %308 = vmatprep.subr.mxu0 0.0
      %309 = vmatpush1.msra.mxu0 0.0
      %310 = vmatprep.mubr.f32.mxu0 0.0
      %311 = vmatmul.mubr.f32.gmra.mrb[0].mxu0 %v241
      %v312 = vpop.f32.mrb[0].mxu0
      %v313 = vadd.f32 %v237, %v312
      %v314 = vpop.f32.mrb[0].mxu0
      %315 = vmatprep.mubr.f32.mxu0 0.0
      %316 = vmatmul.mubr.f32.gmra.mrb[0].mxu0 %v244
      %v317 = vpop.f32.mrb[0].mxu0
      %v318 = vadd.f32 %v237, %v317
      %v319 = vpop.f32.mrb[0].mxu0
      %320 = vdwg.mxu0
      %321 = vadd.xlane.f32.xlu0 %v313
      %v322 = vpop.xlane.xlu0 %321
      %323 = vadd.xlane.f32.xlu0 %v318
      %v324 = vpop.xlane.xlu0 %323
      %v325 = vmul.f32 %v313, %v313
      %v326 = vmul.f32 %v318, %v318
      %327 = vadd.xlane.f32.xlu0 %v325
      %v328 = vpop.xlane.xlu0 %327
      %329 = vadd.xlane.f32.xlu0 %v326
      %v330 = vpop.xlane.xlu0 %329
      %v331 = vmul.f32 %v322, 0.0078125
      %v332 = vmul.f32 %v324, 0.0078125
      %v333 = vmul.f32 %v328, 0.0078125
      %v334 = vmul.f32 %v330, 0.0078125
      %v335 = vmul.f32 %v331, %v331
      %v336 = vmul.f32 %v332, %v332
      %v337 = vsub.f32 %v333, %v335
      %v338 = vsub.f32 %v334, %v336
      %v339 = vmax.f32 %v337, 0.0
      %v340 = vmax.f32 %v338, 0.0
      %v341 = vsub.f32 %v313, %v331
      %v342 = vsub.f32 %v318, %v332
      %v343 = vadd.f32 %v339, 1e-06
      %v344 = vadd.f32 %v340, 1e-06
      %v345 = vrsqrt.pop %v343
      %v346 = vrsqrt.pop %v344
      %v347 = vmul.f32 %v341, %v345
      %v348 = vmul.f32 %v342, %v346
      %v349 = vld [vmem:[%s3] sm:$0x1]
      %v351 = vlaneseq
      %v352 = vshrl.u32 %v351, 7
      %v353 = vsub.s32 0, %v352
      %v354 = vrot.slane %v349, %v353
      %v356 = vmul.f32 %v347, %v354
      %v357 = vmul.f32 %v348, %v354
      %v358 = vld [vmem:[%s4] sm:$0x1]
      %v360 = vlaneseq
      %v361 = vshrl.u32 %v360, 7
      %v362 = vsub.s32 0, %v361
      %v363 = vrot.slane %v358, %v362
      %v365 = vadd.f32 %v356, %v363
      %v366 = vadd.f32 %v357, %v363
      %v367 = vmul.f32 %v365, 0.5
      %v368 = vmul.f32 %v366, 0.5
      %v369 = vmul.f32 %v365, 0.70710677
      %v370 = vmul.f32 %v366, 0.70710677
      %v371 = vand.u32 2147483647, %v369
      %v372 = vand.u32 2147483647, %v370
      %v373 = vmul.f32 %v371, 0.3275911
      %v374 = vmul.f32 %v372, 0.3275911
      %v375 = vadd.f32 %v373, 1.0
      %v376 = vadd.f32 %v374, 1.0
      %v377 = vrcp.pop %v375
      %v378 = vmul.f32 1.0, %v377
      %v379 = vrcp.pop %v376
      %v380 = vmul.f32 1.0, %v379
      %v381 = vmul.f32 %v378, 1.0614054
      %v382 = vmul.f32 %v380, 1.0614054
      %v383 = vadd.f32 %v381, -1.4531521
      %v384 = vadd.f32 %v382, -1.4531521
      %v385 = vmul.f32 %v383, %v378
      %v386 = vmul.f32 %v384, %v380
      %v387 = vadd.f32 %v385, 1.4214138
      %v388 = vadd.f32 %v386, 1.4214138
      %v389 = vmul.f32 %v387, %v378
      %v390 = vmul.f32 %v388, %v380
      %v391 = vadd.f32 %v389, -0.28449672
      %v392 = vadd.f32 %v390, -0.28449672
      %v393 = vmul.f32 %v391, %v378
      %v394 = vmul.f32 %v392, %v380
      %v395 = vadd.f32 %v393, 0.2548296
      %v396 = vadd.f32 %v394, 0.2548296
      %v397 = vmul.f32 %v395, %v378
      %v398 = vmul.f32 %v396, %v380
      %v399 = vsub.f32 0.0, %v371
      %v400 = vsub.f32 0.0, %v372
      %v401 = vmul.f32 %v399, %v371
      %v402 = vmul.f32 %v400, %v372
      %v403 = vmul.f32 %v401, 1.442695
      %v404 = vpow.pop %v403
      %v405 = vmul.f32 %v402, 1.442695
      %v406 = vpow.pop %v405
      %v407 = vmul.f32 %v397, %v404
      %v408 = vmul.f32 %v398, %v406
      %v409 = vsub.f32 1.0, %v407
      %v410 = vsub.f32 1.0, %v408
      %vm411 = vcmp.ge.f32.partialorder %v369, 0.0
      %vm412 = vcmp.ge.f32.partialorder %v370, 0.0
      %v413 = vsub.f32 0.0, %v409
      %v414 = vsub.f32 0.0, %v410
      %v415 = vsel %vm411, %v409, %v413
      %v416 = vsel %vm412, %v410, %v414
      %v417 = vadd.f32 %v415, 1.0
      %v418 = vadd.f32 %v416, 1.0
      %v419 = vmul.f32 %v367, %v417
      %v420 = vmul.f32 %v368, %v418
      %421 = vst [vmem:[%s226] sm:$0xff] %v419
      %422 = vst [vmem:[%s226 + $0x8] sm:$0xff] %v420
      %s423 = smul.u32 2, %s16
      %p424 = scmp.lt.s32.totalorder %s423, 3
      %s425 = scalar_select %p424, %s423, 3
      %s426 = smul.addr %s425, 8
      %s427 = scalar_lea.vmem %s5, %s426
      // Predicated region
      $region41: #{fcu_down_pallas.1} parent=39 // pred_check
        %p428 = pneg %p144
      $region42: #{fcu_down_pallas.1} parent=39 // pred_check_branch
        %430 = sbr.rel (%p428) target = $region44
      $region43: #{fcu_down_pallas.1} parent=39 // pred_region
        %s431 = smul.u32 2, %s16
      $region44: #{fcu_down_pallas.1} parent=39 // pred_fallthru
        _
    $region40: #{fcu_down_pallas.1} parent=5 // pred_fallthru
      _
    %p432 = scmp.le.s32.totalorder 2, %s11
    // Predicated region
    $region45: #{fcu_down_pallas.1} parent=5 // pred_check
      %p433 = pneg %p432
    $region46: #{fcu_down_pallas.1} parent=5 // pred_check_branch
      %435 = sbr.rel (%p433) target = $region48
    $region47: #{fcu_down_pallas.1} parent=5 // pred_region
      %s436 = ssub.s32 %s11, 2
      // Predicated region
      $region49: #{fcu_down_pallas.1} parent=47 // pred_check
        %p437 = pneg %p150
      $region50: #{fcu_down_pallas.1} parent=47 // pred_check_branch
        %439 = sbr.rel (%p437) target = $region52
      $region51: #{fcu_down_pallas.1} parent=47 // pred_region
        %s440 = smul.u32 2, %s17
        %p441 = scmp.lt.s32.totalorder %s440, 3
        %s442 = scalar_select %p441, %s440, 3
        %s443 = smul.addr %s442, 8
        %s444 = scalar_lea.vmem %s5, %s443
      $region52: #{fcu_down_pallas.1} parent=47 // pred_fallthru
        _
    $region48: #{fcu_down_pallas.1} parent=5 // pred_fallthru
      _
  $region6: #{fcu_down_pallas.1} parent=0 // loop_footer
    %s15 = sadd.s32 1, %s11
  $region7: #{fcu_down_pallas.1} parent=0 // loop_footer_branch
    %10 = sbr.rel target = $region3
  $region8: #{fcu_down_pallas.1} parent=0 // loop_exit
    _

</llo_original>
